<compile_context>
chip_gen: v7x
topology: tpu7x:2x2x1
jax: 0.10.0
libtpu: 0.0.40
codegen_flags: <defaults>
</compile_context>

<pallas_src>
import jax
import jax.numpy as jnp
from jax.experimental import pallas as pl
from jax.experimental.pallas import tpu as pltpu

HIDDEN = 256


def _actor_kernel(ma_ref,
                  s_ref,
                  w1_ref, b1_ref,
                  w2_ref, b2_ref,
                  w3_ref, b3_ref,
                  w4_ref, b4_ref,
                  w5_ref, b5_ref,
                  o_ref):
    max_action = ma_ref[0, 0]
    cdt = w1_ref.dtype  # compute dtype for MXU inputs (bf16 by default)

    def dense(x, w_ref, b_ref):
        # bf16 x bf16 -> f32 accumulation on the MXU, f32 bias add.
        return jnp.dot(x.astype(cdt), w_ref[...],
                       preferred_element_type=jnp.float32) + b_ref[...]

    x = s_ref[...]
    x = jnp.maximum(dense(x, w1_ref, b1_ref), 0.0)
    x = jnp.maximum(dense(x, w2_ref, b2_ref), 0.0)
    x = jnp.maximum(dense(x, w3_ref, b3_ref), 0.0)
    x = jnp.maximum(dense(x, w4_ref, b4_ref), 0.0)
    a = jnp.tanh(dense(x, w5_ref, b5_ref))
    o_ref[...] = (max_action * a).astype(o_ref.dtype)


def actor_forward(state, params, max_action, *, block_batch=256):
    """state: (B, n_states) f32.  params: dict of w1..w5 (in,out), b1..b5 (1,out).
    Returns (B, n_actions) f32."""
    batch, n_states = state.shape
    n_actions = params["w5"].shape[1]

    # Pick a batch tile: multiple of 8 (f32 sublane), capped at block_batch.
    padded = ((batch + 7) // 8) * 8
    tb = min(block_batch, padded)
    padded = ((padded + tb - 1) // tb) * tb
    if padded != batch:
        state = jnp.pad(state, ((0, padded - batch), (0, 0)))
    nb = padded // tb

    ma_arr = jnp.full((1, 1), max_action, dtype=jnp.float32)

    operands = [ma_arr, state]
    in_specs = [
        # max_action: one SMEM scalar (no recompile when it changes).
        pl.BlockSpec((1, 1), lambda i: (0, 0), memory_space=pltpu.SMEM),
        # state: tiled over batch, pipelined through VMEM.
        pl.BlockSpec((tb, n_states), lambda i: (i, 0)),
    ]
    # Weights / biases: same block for every grid step -> VMEM-resident,
    # fetched from HBM once per call.
    for li in range(1, 6):
        w = params[f"w{li}"]
        b = params[f"b{li}"]
        operands += [w, b]
        in_specs += [
            pl.BlockSpec(w.shape, lambda i: (0, 0)),
            pl.BlockSpec(b.shape, lambda i: (0, 0)),
        ]

    out = pl.pallas_call(
        _actor_kernel,
        out_shape=jax.ShapeDtypeStruct((padded, n_actions), jnp.float32),
        grid=(nb,),
        in_specs=in_specs,
        out_specs=pl.BlockSpec((tb, n_actions), lambda i: (i, 0)),
        compiler_params=pltpu.CompilerParams(
            dimension_semantics=("parallel",)),
    )(*operands)

    return out[:batch]


def init_actor_params(key, n_states, n_actions, init_w=0.003,
                      param_dtype=jnp.bfloat16):
    """Mirrors PyTorch defaults: uniform(+-1/sqrt(fan_in)) for l1..l4 weight/bias,
    uniform(-init_w, init_w) for l5 weight & bias.  Weights stored as
    (in, out) in `param_dtype` (bf16 by default); biases stay f32."""
    keys = jax.random.split(key, 10)
    dims = [(n_states, HIDDEN), (HIDDEN, HIDDEN), (HIDDEN, HIDDEN), (HIDDEN, HIDDEN)]
    params = {}
    for i, (fan_in, fan_out) in enumerate(dims, start=1):
        bound = 1.0 / float(fan_in) ** 0.5
        params[f"w{i}"] = jax.random.uniform(
            keys[2 * (i - 1)], (fan_in, fan_out), jnp.float32, -bound, bound
        ).astype(param_dtype)
        params[f"b{i}"] = jax.random.uniform(
            keys[2 * (i - 1) + 1], (1, fan_out), jnp.float32, -bound, bound)
    params["w5"] = jax.random.uniform(
        keys[8], (HIDDEN, n_actions), jnp.float32, -init_w, init_w
    ).astype(param_dtype)
    params["b5"] = jax.random.uniform(
        keys[9], (1, n_actions), jnp.float32, -init_w, init_w)
    return params


def actor_forward_ref(state, params, max_action):
    """Pure-JAX reference mirroring the kernel's compute exactly
    (bf16 MXU inputs, f32 accumulation, f32 bias)."""
    cdt = params["w1"].dtype
    x = state
    for i in range(1, 5):
        x = jnp.maximum(
            jnp.dot(x.astype(cdt), params[f"w{i}"],
                    preferred_element_type=jnp.float32) + params[f"b{i}"], 0.0)
    a = jnp.tanh(
        jnp.dot(x.astype(cdt), params["w5"],
                preferred_element_type=jnp.float32) + params["b5"])
    return max_action * a


if __name__ == "__main__":
    key = jax.random.PRNGKey(0)
    k_param, k_state = jax.random.split(key)

    n_states = 32     # input_dim == n_states
    n_actions = 8     # output_dim == n_actions
    max_action = 2.0
    batch = 8         # small demo batch (kernel scales to large B via the grid)

    params = init_actor_params(k_param, n_states, n_actions, init_w=0.003)
    state = jax.random.normal(k_state, (batch, n_states), jnp.float32)

    out = actor_forward(state, params, max_action)
    out = jax.block_until_ready(out)

    ref = actor_forward_ref(state, params, max_action)
    assert out.shape == (batch, n_actions)
    assert jnp.allclose(out, ref, atol=1e-3, rtol=1e-3), "mismatch vs reference"

    print("KERNEL_OK")
</pallas_src>

<mosaic_0001>
module attributes {stable_mosaic.version = 11 : i64} {
  func.func @_actor_kernel(%arg0: i32, %arg1: memref<1x1xf32, #tpu.memory_space<smem>>, %arg2: memref<8x32xf32, #tpu.memory_space<vmem>>, %arg3: memref<32x256xbf16, #tpu.memory_space<vmem>>, %arg4: memref<1x256xf32, #tpu.memory_space<vmem>>, %arg5: memref<256x256xbf16, #tpu.memory_space<vmem>>, %arg6: memref<1x256xf32, #tpu.memory_space<vmem>>, %arg7: memref<256x256xbf16, #tpu.memory_space<vmem>>, %arg8: memref<1x256xf32, #tpu.memory_space<vmem>>, %arg9: memref<256x256xbf16, #tpu.memory_space<vmem>>, %arg10: memref<1x256xf32, #tpu.memory_space<vmem>>, %arg11: memref<256x8xbf16, #tpu.memory_space<vmem>>, %arg12: memref<1x8xf32, #tpu.memory_space<vmem>>, %arg13: memref<8x8xf32, #tpu.memory_space<vmem>>) attributes {dimension_semantics = [#tpu.dimension_semantics<parallel>], iteration_bounds = array<i64: 1>, scalar_prefetch = 0 : i64, scratch_operands = 0 : i64, tpu.core_type = #tpu.core_type<tc>, window_params = [{transform_indices = @transform_0, window_bounds = array<i64: 1, 1>}, {transform_indices = @transform_1, window_bounds = array<i64: 8, 32>}, {pipeline_mode = #tpu.pipeline_mode<synchronous>, transform_indices = @transform_2, window_bounds = array<i64: 32, 256>}, {pipeline_mode = #tpu.pipeline_mode<synchronous>, transform_indices = @transform_3, window_bounds = array<i64: 1, 256>}, {pipeline_mode = #tpu.pipeline_mode<synchronous>, transform_indices = @transform_4, window_bounds = array<i64: 256, 256>}, {pipeline_mode = #tpu.pipeline_mode<synchronous>, transform_indices = @transform_5, window_bounds = array<i64: 1, 256>}, {pipeline_mode = #tpu.pipeline_mode<synchronous>, transform_indices = @transform_6, window_bounds = array<i64: 256, 256>}, {pipeline_mode = #tpu.pipeline_mode<synchronous>, transform_indices = @transform_7, window_bounds = array<i64: 1, 256>}, {pipeline_mode = #tpu.pipeline_mode<synchronous>, transform_indices = @transform_8, window_bounds = array<i64: 256, 256>}, {pipeline_mode = #tpu.pipeline_mode<synchronous>, transform_indices = @transform_9, window_bounds = array<i64: 1, 256>}, {pipeline_mode = #tpu.pipeline_mode<synchronous>, transform_indices = @transform_10, window_bounds = array<i64: 256, 8>}, {pipeline_mode = #tpu.pipeline_mode<synchronous>, transform_indices = @transform_11, window_bounds = array<i64: 1, 8>}, {transform_indices = @transform_12, window_bounds = array<i64: 8, 8>}]} {
    %c0 = arith.constant 0 : index
    %c0_0 = arith.constant 0 : index
    %0 = memref.load %arg1[%c0, %c0_0] : memref<1x1xf32, #tpu.memory_space<smem>>
    %c0_1 = arith.constant 0 : index
    %c0_2 = arith.constant 0 : index
    %1 = vector.load %arg2[%c0_1, %c0_2] : memref<8x32xf32, #tpu.memory_space<vmem>>, vector<8x32xf32>
    %2 = arith.truncf %1 : vector<8x32xf32> to vector<8x32xbf16>
    %c0_3 = arith.constant 0 : index
    %c0_4 = arith.constant 0 : index
    %3 = vector.load %arg3[%c0_3, %c0_4] : memref<32x256xbf16, #tpu.memory_space<vmem>>, vector<32x256xbf16>
    %cst = arith.constant dense<0.000000e+00> : vector<8x256xf32>
    %4 = tpu.matmul %2, %3, %cst {dimension_numbers = #tpu.dot_dimension_numbers<[1], [0], [0], [1], [0, 0, 1, 1], [], []>} : vector<8x32xbf16>, vector<32x256xbf16>, vector<8x256xf32> -> vector<8x256xf32>
    %c0_5 = arith.constant 0 : index
    %c0_6 = arith.constant 0 : index
    %5 = vector.load %arg4[%c0_5, %c0_6] : memref<1x256xf32, #tpu.memory_space<vmem>>, vector<1x256xf32>
    %6 = vector.broadcast %5 : vector<1x256xf32> to vector<8x256xf32>
    %7 = arith.addf %4, %6 : vector<8x256xf32>
    %cst_7 = arith.constant 0.000000e+00 : f32
    %8 = vector.broadcast %cst_7 : f32 to vector<8x256xf32>
    %9 = arith.maximumf %7, %8 : vector<8x256xf32>
    %10 = arith.truncf %9 : vector<8x256xf32> to vector<8x256xbf16>
    %c0_8 = arith.constant 0 : index
    %c0_9 = arith.constant 0 : index
    %11 = vector.load %arg5[%c0_8, %c0_9] : memref<256x256xbf16, #tpu.memory_space<vmem>>, vector<256x256xbf16>
    %cst_10 = arith.constant dense<0.000000e+00> : vector<8x256xf32>
    %12 = tpu.matmul %10, %11, %cst_10 {dimension_numbers = #tpu.dot_dimension_numbers<[1], [0], [0], [1], [0, 0, 1, 1], [], []>} : vector<8x256xbf16>, vector<256x256xbf16>, vector<8x256xf32> -> vector<8x256xf32>
    %c0_11 = arith.constant 0 : index
    %c0_12 = arith.constant 0 : index
    %13 = vector.load %arg6[%c0_11, %c0_12] : memref<1x256xf32, #tpu.memory_space<vmem>>, vector<1x256xf32>
    %14 = vector.broadcast %13 : vector<1x256xf32> to vector<8x256xf32>
    %15 = arith.addf %12, %14 : vector<8x256xf32>
    %cst_13 = arith.constant 0.000000e+00 : f32
    %16 = vector.broadcast %cst_13 : f32 to vector<8x256xf32>
    %17 = arith.maximumf %15, %16 : vector<8x256xf32>
    %18 = arith.truncf %17 : vector<8x256xf32> to vector<8x256xbf16>
    %c0_14 = arith.constant 0 : index
    %c0_15 = arith.constant 0 : index
    %19 = vector.load %arg7[%c0_14, %c0_15] : memref<256x256xbf16, #tpu.memory_space<vmem>>, vector<256x256xbf16>
    %cst_16 = arith.constant dense<0.000000e+00> : vector<8x256xf32>
    %20 = tpu.matmul %18, %19, %cst_16 {dimension_numbers = #tpu.dot_dimension_numbers<[1], [0], [0], [1], [0, 0, 1, 1], [], []>} : vector<8x256xbf16>, vector<256x256xbf16>, vector<8x256xf32> -> vector<8x256xf32>
    %c0_17 = arith.constant 0 : index
    %c0_18 = arith.constant 0 : index
    %21 = vector.load %arg8[%c0_17, %c0_18] : memref<1x256xf32, #tpu.memory_space<vmem>>, vector<1x256xf32>
    %22 = vector.broadcast %21 : vector<1x256xf32> to vector<8x256xf32>
    %23 = arith.addf %20, %22 : vector<8x256xf32>
    %cst_19 = arith.constant 0.000000e+00 : f32
    %24 = vector.broadcast %cst_19 : f32 to vector<8x256xf32>
    %25 = arith.maximumf %23, %24 : vector<8x256xf32>
    %26 = arith.truncf %25 : vector<8x256xf32> to vector<8x256xbf16>
    %c0_20 = arith.constant 0 : index
    %c0_21 = arith.constant 0 : index
    %27 = vector.load %arg9[%c0_20, %c0_21] : memref<256x256xbf16, #tpu.memory_space<vmem>>, vector<256x256xbf16>
    %cst_22 = arith.constant dense<0.000000e+00> : vector<8x256xf32>
    %28 = tpu.matmul %26, %27, %cst_22 {dimension_numbers = #tpu.dot_dimension_numbers<[1], [0], [0], [1], [0, 0, 1, 1], [], []>} : vector<8x256xbf16>, vector<256x256xbf16>, vector<8x256xf32> -> vector<8x256xf32>
    %c0_23 = arith.constant 0 : index
    %c0_24 = arith.constant 0 : index
    %29 = vector.load %arg10[%c0_23, %c0_24] : memref<1x256xf32, #tpu.memory_space<vmem>>, vector<1x256xf32>
    %30 = vector.broadcast %29 : vector<1x256xf32> to vector<8x256xf32>
    %31 = arith.addf %28, %30 : vector<8x256xf32>
    %cst_25 = arith.constant 0.000000e+00 : f32
    %32 = vector.broadcast %cst_25 : f32 to vector<8x256xf32>
    %33 = arith.maximumf %31, %32 : vector<8x256xf32>
    %34 = arith.truncf %33 : vector<8x256xf32> to vector<8x256xbf16>
    %c0_26 = arith.constant 0 : index
    %c0_27 = arith.constant 0 : index
    %35 = vector.load %arg11[%c0_26, %c0_27] : memref<256x8xbf16, #tpu.memory_space<vmem>>, vector<256x8xbf16>
    %cst_28 = arith.constant dense<0.000000e+00> : vector<8x8xf32>
    %36 = tpu.matmul %34, %35, %cst_28 {dimension_numbers = #tpu.dot_dimension_numbers<[1], [0], [0], [1], [0, 0, 1, 1], [], []>} : vector<8x256xbf16>, vector<256x8xbf16>, vector<8x8xf32> -> vector<8x8xf32>
    %c0_29 = arith.constant 0 : index
    %c0_30 = arith.constant 0 : index
    %37 = vector.load %arg12[%c0_29, %c0_30] : memref<1x8xf32, #tpu.memory_space<vmem>>, vector<1x8xf32>
    %38 = vector.broadcast %37 : vector<1x8xf32> to vector<8x8xf32>
    %39 = arith.addf %36, %38 : vector<8x8xf32>
    %40 = math.tanh %39 : vector<8x8xf32>
    %41 = vector.broadcast %0 : f32 to vector<8x8xf32>
    %42 = arith.mulf %41, %40 : vector<8x8xf32>
    %c0_31 = arith.constant 0 : index
    %c0_32 = arith.constant 0 : index
    %43 = vector.load %arg13[%c0_31, %c0_32] : memref<8x8xf32, #tpu.memory_space<vmem>>, vector<8x8xf32>
    tpu.vector_store %arg13[%c0_31, %c0_32], %42 {strides = array<i32>} : memref<8x8xf32, #tpu.memory_space<vmem>>, vector<8x8xf32>,
    return
  }
  func.func @transform_0(%arg0: i32) -> (i32, i32) {
    %c0_i32 = arith.constant 0 : i32
    %c0_i32_0 = arith.constant 0 : i32
    %c0_i32_1 = arith.constant 0 : i32
    return %c0_i32, %c0_i32_0 : i32, i32
  }
  func.func @transform_1(%arg0: i32) -> (i32, i32) {
    %c0_i32 = arith.constant 0 : i32
    %c0_i32_0 = arith.constant 0 : i32
    return %arg0, %c0_i32 : i32, i32
  }
  func.func @transform_2(%arg0: i32) -> (i32, i32) {
    %c0_i32 = arith.constant 0 : i32
    %c0_i32_0 = arith.constant 0 : i32
    %c0_i32_1 = arith.constant 0 : i32
    return %c0_i32, %c0_i32_0 : i32, i32
  }
  func.func @transform_3(%arg0: i32) -> (i32, i32) {
    %c0_i32 = arith.constant 0 : i32
    %c0_i32_0 = arith.constant 0 : i32
    %c0_i32_1 = arith.constant 0 : i32
    return %c0_i32, %c0_i32_0 : i32, i32
  }
  func.func @transform_4(%arg0: i32) -> (i32, i32) {
    %c0_i32 = arith.constant 0 : i32
    %c0_i32_0 = arith.constant 0 : i32
    %c0_i32_1 = arith.constant 0 : i32
    return %c0_i32, %c0_i32_0 : i32, i32
  }
  func.func @transform_5(%arg0: i32) -> (i32, i32) {
    %c0_i32 = arith.constant 0 : i32
    %c0_i32_0 = arith.constant 0 : i32
    %c0_i32_1 = arith.constant 0 : i32
    return %c0_i32, %c0_i32_0 : i32, i32
  }
  func.func @transform_6(%arg0: i32) -> (i32, i32) {
    %c0_i32 = arith.constant 0 : i32
    %c0_i32_0 = arith.constant 0 : i32
    %c0_i32_1 = arith.constant 0 : i32
    return %c0_i32, %c0_i32_0 : i32, i32
  }
  func.func @transform_7(%arg0: i32) -> (i32, i32) {
    %c0_i32 = arith.constant 0 : i32
    %c0_i32_0 = arith.constant 0 : i32
    %c0_i32_1 = arith.constant 0 : i32
    return %c0_i32, %c0_i32_0 : i32, i32
  }
  func.func @transform_8(%arg0: i32) -> (i32, i32) {
    %c0_i32 = arith.constant 0 : i32
    %c0_i32_0 = arith.constant 0 : i32
    %c0_i32_1 = arith.constant 0 : i32
    return %c0_i32, %c0_i32_0 : i32, i32
  }
  func.func @transform_9(%arg0: i32) -> (i32, i32) {
    %c0_i32 = arith.constant 0 : i32
    %c0_i32_0 = arith.constant 0 : i32
    %c0_i32_1 = arith.constant 0 : i32
    return %c0_i32, %c0_i32_0 : i32, i32
  }
  func.func @transform_10(%arg0: i32) -> (i32, i32) {
    %c0_i32 = arith.constant 0 : i32
    %c0_i32_0 = arith.constant 0 : i32
    %c0_i32_1 = arith.constant 0 : i32
    return %c0_i32, %c0_i32_0 : i32, i32
  }
  func.func @transform_11(%arg0: i32) -> (i32, i32) {
    %c0_i32 = arith.constant 0 : i32
    %c0_i32_0 = arith.constant 0 : i32
    %c0_i32_1 = arith.constant 0 : i32
    return %c0_i32, %c0_i32_0 : i32, i32
  }
  func.func @transform_12(%arg0: i32) -> (i32, i32) {
    %c0_i32 = arith.constant 0 : i32
    %c0_i32_0 = arith.constant 0 : i32
    return %arg0, %c0_i32 : i32, i32
  }
}

</mosaic_0001>

<llo_original>
// kernel: tpu_custom_call.1
$region0: #{tpu_custom_call.1}
  #allocation0 [shape = 'u32[]', space=smem, size = 0x4, offset = 0x4, fixed_abs, tag = 'smem constant byte address 0x4 - core index']
  #allocation1 [shape = 'u32[144,128]{1,0:T(1,128)}', space=vmem, size = 0x12000, scoped, tag = 'internal scratch']
  #allocation2 [shape = 'f32[1,1]{1,0:T(1,128)S(6)}', space=smem, size = 0x200, scoped, tag = 'scoped memory for tpu_custom_call.1']
  %s0 = inlined_call_operand.<no memory space> [shape: f32[1,1], index: 0, kind: input, shape index: {}]
  %s1 = inlined_call_operand.vmem [shape: f32[8,32], index: 1, kind: input, shape index: {}]
  %s2 = inlined_call_operand.vmem [shape: bf16[32,256], index: 2, kind: input, shape index: {}]
  %s3 = inlined_call_operand.vmem [shape: f32[1,256], index: 3, kind: input, shape index: {}]
  %s4 = inlined_call_operand.hbm [shape: bf16[256,256], index: 4, kind: input, shape index: {}]
  %s5 = inlined_call_operand.vmem [shape: f32[1,256], index: 5, kind: input, shape index: {}]
  %s6 = inlined_call_operand.hbm [shape: bf16[256,256], index: 6, kind: input, shape index: {}]
  %s7 = inlined_call_operand.vmem [shape: f32[1,256], index: 7, kind: input, shape index: {}]
  %s8 = inlined_call_operand.hbm [shape: bf16[256,256], index: 8, kind: input, shape index: {}]
  %s9 = inlined_call_operand.vmem [shape: f32[1,256], index: 9, kind: input, shape index: {}]
  %s10 = inlined_call_operand.vmem [shape: bf16[256,8], index: 10, kind: input, shape index: {}]
  %s11 = inlined_call_operand.vmem [shape: f32[1,8], index: 11, kind: input, shape index: {}]
  %s12 = inlined_call_operand.hbm [shape: f32[8,8], index: 12, kind: output, shape index: {}]
  %s13 = sld [smem:[#allocation0]]
  $region70: #{tpu_custom_call.1} parent=0
    _
  %s15 = ssub.s32 1, %s13
  %s16 = scalar_select 0, %s15, %s13
  %17 = sst [smem:[#allocation2]] %s0
  $region1: #{tpu_custom_call.1} parent=0
    #allocation3 [shape = 'u8[131072]{0}', space=vmem, size = 0x20000, scoped, tag = 'input window, operand 4, single buffered']
    #allocation4 [shape = 's32[1]{0}', space=sflag, size = 0x4, scoped, tag = 'scoped memory for tpu_custom_call.1']
    #allocation5 [shape = 's32[1]{0}', space=sflag, size = 0x4, scoped, tag = 'scoped memory for tpu_custom_call.1']
    #allocation6 [shape = 'u8[131072]{0}', space=vmem, size = 0x20000, scoped, tag = 'input window, operand 6, single buffered']
    #allocation7 [shape = 's32[1]{0}', space=sflag, size = 0x4, scoped, tag = 'scoped memory for tpu_custom_call.1']
    #allocation8 [shape = 'u8[131072]{0}', space=vmem, size = 0x20000, scoped, tag = 'input window, operand 8, single buffered']
    #allocation9 [shape = 'u8[4096]{0}', space=vmem, size = 0x1000, scoped, tag = 'output window, operand 0, single buffered']
    %18 = vsyncpa [#allocation4], 0
    %19 = vsyncpa [#allocation7], 0
    %20 = vsyncpa [#allocation5], 0
    // Predicated region
    $region2: #{tpu_custom_call.1} parent=1 // pred_check
      _
    $region3: #{tpu_custom_call.1} parent=1 // pred_check_branch
      %22 = sbr.rel (0) target = $region5
    $region4: #{tpu_custom_call.1} parent=1 // pred_region
      _
    $region5: #{tpu_custom_call.1} parent=1 // pred_fallthru
      _
    // Predicated region
    $region6: #{tpu_custom_call.1} parent=1 // pred_check
      _
    $region7: #{tpu_custom_call.1} parent=1 // pred_check_branch
      %24 = sbr.rel (0) target = $region9
    $region8: #{tpu_custom_call.1} parent=1 // pred_region
      _
    $region9: #{tpu_custom_call.1} parent=1 // pred_fallthru
      _
    // Predicated region
    $region10: #{tpu_custom_call.1} parent=1 // pred_check
      _
    $region11: #{tpu_custom_call.1} parent=1 // pred_check_branch
      %26 = sbr.rel (0) target = $region13
    $region12: #{tpu_custom_call.1} parent=1 // pred_region
      _
    $region13: #{tpu_custom_call.1} parent=1 // pred_fallthru
      _
    // Predicated region
    $region14: #{tpu_custom_call.1} parent=1 // pred_check
      _
    $region15: #{tpu_custom_call.1} parent=1 // pred_check_branch
      %28 = sbr.rel (0) target = $region17
    $region16: #{tpu_custom_call.1} parent=1 // pred_region
      _
    $region17: #{tpu_custom_call.1} parent=1 // pred_fallthru
      _
    // Predicated region
    $region18: #{tpu_custom_call.1} parent=1 // pred_check
      _
    $region19: #{tpu_custom_call.1} parent=1 // pred_check_branch
      %30 = sbr.rel (0) target = $region21
    $region20: #{tpu_custom_call.1} parent=1 // pred_region
      %s32 = ssub.s32 4096, 4096
      %33 = vsyncadd [#allocation4], %s32
      %s34 = sshll.u32 [#allocation3], 4
      %s35 = int_to_ptr.vmem [resolvable:$true] %s34
      %40 = dma.hbm_to_vmem [thread:$0]  %s4, 4096, %s35, [#allocation4], 128, 128, 8
    $region21: #{tpu_custom_call.1} parent=1 // pred_fallthru
      _
    // Predicated region
    $region22: #{tpu_custom_call.1} parent=1 // pred_check
      _
    $region23: #{tpu_custom_call.1} parent=1 // pred_check_branch
      %42 = sbr.rel (0) target = $region25
    $region24: #{tpu_custom_call.1} parent=1 // pred_region
      _
    $region25: #{tpu_custom_call.1} parent=1 // pred_fallthru
      _
    // Predicated region
    $region26: #{tpu_custom_call.1} parent=1 // pred_check
      _
    $region27: #{tpu_custom_call.1} parent=1 // pred_check_branch
      %44 = sbr.rel (0) target = $region29
    $region28: #{tpu_custom_call.1} parent=1 // pred_region
      %s46 = ssub.s32 4096, 4096
      %47 = vsyncadd [#allocation7], %s46
      %s48 = sshll.u32 [#allocation6], 4
      %s49 = int_to_ptr.vmem [resolvable:$true] %s48
      %54 = dma.hbm_to_vmem [thread:$0]  %s6, 4096, %s49, [#allocation7], 128, 128, 8
    $region29: #{tpu_custom_call.1} parent=1 // pred_fallthru
      _
    // Predicated region
    $region30: #{tpu_custom_call.1} parent=1 // pred_check
      _
    $region31: #{tpu_custom_call.1} parent=1 // pred_check_branch
      %56 = sbr.rel (0) target = $region33
    $region32: #{tpu_custom_call.1} parent=1 // pred_region
      _
    $region33: #{tpu_custom_call.1} parent=1 // pred_fallthru
      _
    // Predicated region
    $region34: #{tpu_custom_call.1} parent=1 // pred_check
      _
    $region35: #{tpu_custom_call.1} parent=1 // pred_check_branch
      %58 = sbr.rel (0) target = $region37
    $region36: #{tpu_custom_call.1} parent=1 // pred_region
      %s60 = ssub.s32 4096, 4096
      %61 = vsyncadd [#allocation7], %s60
      %s62 = sshll.u32 [#allocation8], 4
      %s63 = int_to_ptr.vmem [resolvable:$true] %s62
      %68 = dma.hbm_to_vmem [thread:$0]  %s8, 4096, %s63, [#allocation7], 128, 128, 8
    $region37: #{tpu_custom_call.1} parent=1 // pred_fallthru
      _
    // Predicated region
    $region38: #{tpu_custom_call.1} parent=1 // pred_check
      _
    $region39: #{tpu_custom_call.1} parent=1 // pred_check_branch
      %70 = sbr.rel (0) target = $region41
    $region40: #{tpu_custom_call.1} parent=1 // pred_region
      _
    $region41: #{tpu_custom_call.1} parent=1 // pred_fallthru
      _
    // Predicated region
    $region42: #{tpu_custom_call.1} parent=1 // pred_check
      _
    $region43: #{tpu_custom_call.1} parent=1 // pred_check_branch
      %72 = sbr.rel (0) target = $region45
    $region44: #{tpu_custom_call.1} parent=1 // pred_region
      _
    $region45: #{tpu_custom_call.1} parent=1 // pred_fallthru
      _
    // Predicated region
    $region46: #{tpu_custom_call.1} parent=1 // pred_check
      _
    $region47: #{tpu_custom_call.1} parent=1 // pred_check_branch
      %74 = sbr.rel (0) target = $region49
    $region48: #{tpu_custom_call.1} parent=1 // pred_region
      _
    $region49: #{tpu_custom_call.1} parent=1 // pred_fallthru
      _
    // Predicated region
    $region50: #{tpu_custom_call.1} parent=1 // pred_check
      _
    $region51: #{tpu_custom_call.1} parent=1 // pred_check_branch
      %76 = sbr.rel (0) target = $region53
    $region52: #{tpu_custom_call.1} parent=1 // pred_region
      %77 = dma.done [#allocation4], 4096
    $region53: #{tpu_custom_call.1} parent=1 // pred_fallthru
      _
    // Predicated region
    $region54: #{tpu_custom_call.1} parent=1 // pred_check
      _
    $region55: #{tpu_custom_call.1} parent=1 // pred_check_branch
      %79 = sbr.rel (0) target = $region57
    $region56: #{tpu_custom_call.1} parent=1 // pred_region
      %80 = dma.done [#allocation7], 4096
    $region57: #{tpu_custom_call.1} parent=1 // pred_fallthru
      _
    // Predicated region
    $region58: #{tpu_custom_call.1} parent=1 // pred_check
      _
    $region59: #{tpu_custom_call.1} parent=1 // pred_check_branch
      %82 = sbr.rel (0) target = $region61
    $region60: #{tpu_custom_call.1} parent=1 // pred_region
      %83 = dma.done [#allocation7], 4096
    $region61: #{tpu_custom_call.1} parent=1 // pred_fallthru
      _
    %s85 = sld [smem:[#allocation2]]
    %v86 = vld [vmem:[%s1] sm:$0xff]
    %v87 = vpack.c.bf16 %v86, %v86
    %v88 = vld [vmem:[%s2] sm:$0xff]
    %v89 = vld [vmem:[%s2 + $0x8] sm:$0xff]
    %v90 = vld [vmem:[%s2 + $0x10] sm:$0xff]
    %v91 = vld [vmem:[%s2 + $0x18] sm:$0xff]
    %v92 = vld [vmem:[%s3] sm:$0x3]
    %v94 = vlaneseq
    %v95 = vshrl.u32 %v94, 7
    %v96 = vsub.s32 0, %v95
    %v97 = vrot.slane %v92, %v96
    %v98 = vlaneseq
    %v99 = vshrl.u32 %v98, 7
    %v100 = vsub.s32 1, %v99
    %v101 = vrot.slane %v92, %v100
    %v108 = vunpack.c.l.b16 %v88
    %v109 = vunpack.c.h.b16 %v88
    %v110 = vunpack.c.l.b16 %v89
    %v111 = vunpack.c.h.b16 %v89
    %v112 = vunpack.c.l.b16 %v90
    %v113 = vunpack.c.h.b16 %v90
    %v114 = vunpack.c.l.b16 %v91
    %v115 = vunpack.c.h.b16 %v91
    %v116 = vpack.c.b16 %v110, %v108
    %v117 = vpack.c.b16 %v111, %v109
    %v118 = vpack.c.b16 %v114, %v112
    %v119 = vpack.c.b16 %v115, %v113
    %vm124 = vcmask 261120
    %v126 = vsel %vm124, %v87, 0
    %128 = vmatprep.subr.bf16.mxu0 %v117
    %129 = vmatpush1.bf16.msra.mxu0 %v116
    %130 = vmatprep.subr.bf16.mxu0 %v119
    %131 = vmatpush1.bf16.msra.mxu0 %v118
    %132 = vmatprep.subr.bf16.mxu0 0
    %133 = vmatpush1.bf16.msra.mxu0 0
    %134 = vmatprep.subr.bf16.mxu0 0
    %135 = vmatpush1.bf16.msra.mxu0 0
    %136 = vmatprep.subr.bf16.mxu0 0
    %137 = vmatpush1.bf16.msra.mxu0 0
    %138 = vmatprep.subr.bf16.mxu0 0
    %139 = vmatpush1.bf16.msra.mxu0 0
    %140 = vmatprep.subr.bf16.mxu0 0
    %141 = vmatpush1.bf16.msra.mxu0 0
    %142 = vmatprep.subr.bf16.mxu0 0
    %143 = vmatpush1.bf16.msra.mxu0 0
    %144 = vmatprep.subr.bf16.mxu0 0
    %145 = vmatpush1.bf16.msra.mxu0 0
    %146 = vmatprep.subr.bf16.mxu0 0
    %147 = vmatpush1.bf16.msra.mxu0 0
    %148 = vmatprep.subr.bf16.mxu0 0
    %149 = vmatpush1.bf16.msra.mxu0 0
    %150 = vmatprep.subr.bf16.mxu0 0
    %151 = vmatpush1.bf16.msra.mxu0 0
    %152 = vmatprep.subr.bf16.mxu0 0
    %153 = vmatpush1.bf16.msra.mxu0 0
    %154 = vmatprep.subr.bf16.mxu0 0
    %155 = vmatpush1.bf16.msra.mxu0 0
    %156 = vmatprep.subr.bf16.mxu0 0
    %157 = vmatpush1.bf16.msra.mxu0 0
    %158 = vmatprep.subr.bf16.mxu0 0
    %159 = vmatpush1.bf16.msra.mxu0 0
    %160 = vmatprep.mubr.bf16.mxu0 0
    %161 = vmatmul.mubr.bf16.gmra.mrb[0].mxu0 %v126
    %v162 = vpop.f32.mrb[0].mxu0
    %v163 = vadd.f32 %v97, %v162
    %v164 = vpop.f32.mrb[0].mxu0
    %v165 = vadd.f32 %v101, %v164
    %v166 = vpop.f32.mrb[0].mxu0
    %v167 = vpop.f32.mrb[0].mxu0
    %168 = vdwg.mxu0
    %v169 = vmax.f32 %v163, 0.0
    %v170 = vmax.f32 %v165, 0.0
    %v171 = vpack.c.bf16 %v169, %v169
    %v172 = vpack.c.bf16 %v170, %v170
    %v173 = vld [vmem:[#allocation3] sm:$0xff]
    %v174 = vld [vmem:[#allocation3 + $0x8] sm:$0xff]
    %v175 = vld [vmem:[#allocation3 + $0x10] sm:$0xff]
    %v176 = vld [vmem:[#allocation3 + $0x18] sm:$0xff]
    %v177 = vld [vmem:[#allocation3 + $0x20] sm:$0xff]
    %v178 = vld [vmem:[#allocation3 + $0x28] sm:$0xff]
    %v179 = vld [vmem:[#allocation3 + $0x30] sm:$0xff]
    %v180 = vld [vmem:[#allocation3 + $0x38] sm:$0xff]
    %v181 = vld [vmem:[#allocation3 + $0x40] sm:$0xff]
    %v182 = vld [vmem:[#allocation3 + $0x48] sm:$0xff]
    %v183 = vld [vmem:[#allocation3 + $0x50] sm:$0xff]
    %v184 = vld [vmem:[#allocation3 + $0x58] sm:$0xff]
    %v185 = vld [vmem:[#allocation3 + $0x60] sm:$0xff]
    %v186 = vld [vmem:[#allocation3 + $0x68] sm:$0xff]
    %v187 = vld [vmem:[#allocation3 + $0x70] sm:$0xff]
    %v188 = vld [vmem:[#allocation3 + $0x78] sm:$0xff]
    %v189 = vld [vmem:[#allocation3 + $0x80] sm:$0xff]
    %v190 = vld [vmem:[#allocation3 + $0x88] sm:$0xff]
    %v191 = vld [vmem:[#allocation3 + $0x90] sm:$0xff]
    %v192 = vld [vmem:[#allocation3 + $0x98] sm:$0xff]
    %v193 = vld [vmem:[#allocation3 + $0xa0] sm:$0xff]
    %v194 = vld [vmem:[#allocation3 + $0xa8] sm:$0xff]
    %v195 = vld [vmem:[#allocation3 + $0xb0] sm:$0xff]
    %v196 = vld [vmem:[#allocation3 + $0xb8] sm:$0xff]
    %v197 = vld [vmem:[#allocation3 + $0xc0] sm:$0xff]
    %v198 = vld [vmem:[#allocation3 + $0xc8] sm:$0xff]
    %v199 = vld [vmem:[#allocation3 + $0xd0] sm:$0xff]
    %v200 = vld [vmem:[#allocation3 + $0xd8] sm:$0xff]
    %v201 = vld [vmem:[#allocation3 + $0xe0] sm:$0xff]
    %v202 = vld [vmem:[#allocation3 + $0xe8] sm:$0xff]
    %v203 = vld [vmem:[#allocation3 + $0xf0] sm:$0xff]
    %v204 = vld [vmem:[#allocation3 + $0xf8] sm:$0xff]
    %v205 = vld [vmem:[%s5] sm:$0x3]
    %v207 = vlaneseq
    %v208 = vshrl.u32 %v207, 7
    %v209 = vsub.s32 0, %v208
    %v210 = vrot.slane %v205, %v209
    %v211 = vlaneseq
    %v212 = vshrl.u32 %v211, 7
    %v213 = vsub.s32 1, %v212
    %v214 = vrot.slane %v205, %v213
    %v249 = vunpack.c.l.b16 %v173
    %v250 = vunpack.c.h.b16 %v173
    %v251 = vunpack.c.l.b16 %v174
    %v252 = vunpack.c.h.b16 %v174
    %v253 = vunpack.c.l.b16 %v175
    %v254 = vunpack.c.h.b16 %v175
    %v255 = vunpack.c.l.b16 %v176
    %v256 = vunpack.c.h.b16 %v176
    %v257 = vunpack.c.l.b16 %v177
    %v258 = vunpack.c.h.b16 %v177
    %v259 = vunpack.c.l.b16 %v178
    %v260 = vunpack.c.h.b16 %v178
    %v261 = vunpack.c.l.b16 %v179
    %v262 = vunpack.c.h.b16 %v179
    %v263 = vunpack.c.l.b16 %v180
    %v264 = vunpack.c.h.b16 %v180
    %v265 = vunpack.c.l.b16 %v181
    %v266 = vunpack.c.h.b16 %v181
    %v267 = vunpack.c.l.b16 %v182
    %v268 = vunpack.c.h.b16 %v182
    %v269 = vunpack.c.l.b16 %v183
    %v270 = vunpack.c.h.b16 %v183
    %v271 = vunpack.c.l.b16 %v184
    %v272 = vunpack.c.h.b16 %v184
    %v273 = vunpack.c.l.b16 %v185
    %v274 = vunpack.c.h.b16 %v185
    %v275 = vunpack.c.l.b16 %v186
    %v276 = vunpack.c.h.b16 %v186
    %v277 = vunpack.c.l.b16 %v187
    %v278 = vunpack.c.h.b16 %v187
    %v279 = vunpack.c.l.b16 %v188
    %v280 = vunpack.c.h.b16 %v188
    %v281 = vunpack.c.l.b16 %v189
    %v282 = vunpack.c.h.b16 %v189
    %v283 = vunpack.c.l.b16 %v190
    %v284 = vunpack.c.h.b16 %v190
    %v285 = vunpack.c.l.b16 %v191
    %v286 = vunpack.c.h.b16 %v191
    %v287 = vunpack.c.l.b16 %v192
    %v288 = vunpack.c.h.b16 %v192
    %v289 = vunpack.c.l.b16 %v193
    %v290 = vunpack.c.h.b16 %v193
    %v291 = vunpack.c.l.b16 %v194
    %v292 = vunpack.c.h.b16 %v194
    %v293 = vunpack.c.l.b16 %v195
    %v294 = vunpack.c.h.b16 %v195
    %v295 = vunpack.c.l.b16 %v196
    %v296 = vunpack.c.h.b16 %v196
    %v297 = vunpack.c.l.b16 %v197
    %v298 = vunpack.c.h.b16 %v197
    %v299 = vunpack.c.l.b16 %v198
    %v300 = vunpack.c.h.b16 %v198
    %v301 = vunpack.c.l.b16 %v199
    %v302 = vunpack.c.h.b16 %v199
    %v303 = vunpack.c.l.b16 %v200
    %v304 = vunpack.c.h.b16 %v200
    %v305 = vunpack.c.l.b16 %v201
    %v306 = vunpack.c.h.b16 %v201
    %v307 = vunpack.c.l.b16 %v202
    %v308 = vunpack.c.h.b16 %v202
    %v309 = vunpack.c.l.b16 %v203
    %v310 = vunpack.c.h.b16 %v203
    %v311 = vunpack.c.l.b16 %v204
    %v312 = vunpack.c.h.b16 %v204
    %v313 = vpack.c.b16 %v251, %v249
    %v314 = vpack.c.b16 %v252, %v250
    %v315 = vpack.c.b16 %v255, %v253
    %v316 = vpack.c.b16 %v256, %v254
    %v317 = vpack.c.b16 %v259, %v257
    %v318 = vpack.c.b16 %v260, %v258
    %v319 = vpack.c.b16 %v263, %v261
    %v320 = vpack.c.b16 %v264, %v262
    %v321 = vpack.c.b16 %v267, %v265
    %v322 = vpack.c.b16 %v268, %v266
    %v323 = vpack.c.b16 %v271, %v269
    %v324 = vpack.c.b16 %v272, %v270
    %v325 = vpack.c.b16 %v275, %v273
    %v326 = vpack.c.b16 %v276, %v274
    %v327 = vpack.c.b16 %v279, %v277
    %v328 = vpack.c.b16 %v280, %v278
    %v329 = vpack.c.b16 %v283, %v281
    %v330 = vpack.c.b16 %v284, %v282
    %v331 = vpack.c.b16 %v287, %v285
    %v332 = vpack.c.b16 %v288, %v286
    %v333 = vpack.c.b16 %v291, %v289
    %v334 = vpack.c.b16 %v292, %v290
    %v335 = vpack.c.b16 %v295, %v293
    %v336 = vpack.c.b16 %v296, %v294
    %v337 = vpack.c.b16 %v299, %v297
    %v338 = vpack.c.b16 %v300, %v298
    %v339 = vpack.c.b16 %v303, %v301
    %v340 = vpack.c.b16 %v304, %v302
    %v341 = vpack.c.b16 %v307, %v305
    %v342 = vpack.c.b16 %v308, %v306
    %v343 = vpack.c.b16 %v311, %v309
    %v344 = vpack.c.b16 %v312, %v310
    %377 = vmatprep.subr.bf16.mxu0 %v314
    %378 = vmatpush1.bf16.msra.mxu0 %v313
    %379 = vmatprep.subr.bf16.mxu0 %v316
    %380 = vmatpush1.bf16.msra.mxu0 %v315
    %381 = vmatprep.subr.bf16.mxu0 %v318
    %382 = vmatpush1.bf16.msra.mxu0 %v317
    %383 = vmatprep.subr.bf16.mxu0 %v320
    %384 = vmatpush1.bf16.msra.mxu0 %v319
    %385 = vmatprep.subr.bf16.mxu0 %v322
    %386 = vmatpush1.bf16.msra.mxu0 %v321
    %387 = vmatprep.subr.bf16.mxu0 %v324
    %388 = vmatpush1.bf16.msra.mxu0 %v323
    %389 = vmatprep.subr.bf16.mxu0 %v326
    %390 = vmatpush1.bf16.msra.mxu0 %v325
    %391 = vmatprep.subr.bf16.mxu0 %v328
    %392 = vmatpush1.bf16.msra.mxu0 %v327
    %393 = vmatprep.subr.bf16.mxu0 %v330
    %394 = vmatpush1.bf16.msra.mxu0 %v329
    %395 = vmatprep.subr.bf16.mxu0 %v332
    %396 = vmatpush1.bf16.msra.mxu0 %v331
    %397 = vmatprep.subr.bf16.mxu0 %v334
    %398 = vmatpush1.bf16.msra.mxu0 %v333
    %399 = vmatprep.subr.bf16.mxu0 %v336
    %400 = vmatpush1.bf16.msra.mxu0 %v335
    %401 = vmatprep.subr.bf16.mxu0 %v338
    %402 = vmatpush1.bf16.msra.mxu0 %v337
    %403 = vmatprep.subr.bf16.mxu0 %v340
    %404 = vmatpush1.bf16.msra.mxu0 %v339
    %405 = vmatprep.subr.bf16.mxu0 %v342
    %406 = vmatpush1.bf16.msra.mxu0 %v341
    %407 = vmatprep.subr.bf16.mxu0 %v344
    %408 = vmatpush1.bf16.msra.mxu0 %v343
    %409 = vmatprep.mubr.bf16.mxu0 %v172
    %410 = vmatmul.mubr.bf16.gmra.mrb[0].mxu0 %v171
    %v411 = vpop.f32.mrb[0].mxu0
    %v412 = vadd.f32 %v210, %v411
    %v413 = vpop.f32.mrb[0].mxu0
    %v414 = vadd.f32 %v214, %v413
    %v415 = vpop.f32.mrb[0].mxu0
    %v416 = vpop.f32.mrb[0].mxu0
    %417 = vdwg.mxu0
    %v418 = vmax.f32 %v412, 0.0
    %v419 = vmax.f32 %v414, 0.0
    %v420 = vpack.c.bf16 %v418, %v418
    %v421 = vpack.c.bf16 %v419, %v419
    %v422 = vld [vmem:[#allocation6] sm:$0xff]
    %v423 = vld [vmem:[#allocation6 + $0x8] sm:$0xff]
    %v424 = vld [vmem:[#allocation6 + $0x10] sm:$0xff]
    %v425 = vld [vmem:[#allocation6 + $0x18] sm:$0xff]
    %v426 = vld [vmem:[#allocation6 + $0x20] sm:$0xff]
    %v427 = vld [vmem:[#allocation6 + $0x28] sm:$0xff]
    %v428 = vld [vmem:[#allocation6 + $0x30] sm:$0xff]
    %v429 = vld [vmem:[#allocation6 + $0x38] sm:$0xff]
    %v430 = vld [vmem:[#allocation6 + $0x40] sm:$0xff]
    %v431 = vld [vmem:[#allocation6 + $0x48] sm:$0xff]
    %v432 = vld [vmem:[#allocation6 + $0x50] sm:$0xff]
    %v433 = vld [vmem:[#allocation6 + $0x58] sm:$0xff]
    %v434 = vld [vmem:[#allocation6 + $0x60] sm:$0xff]
    %v435 = vld [vmem:[#allocation6 + $0x68] sm:$0xff]
    %v436 = vld [vmem:[#allocation6 + $0x70] sm:$0xff]
    %v437 = vld [vmem:[#allocation6 + $0x78] sm:$0xff]
    %v438 = vld [vmem:[#allocation6 + $0x80] sm:$0xff]
    %v439 = vld [vmem:[#allocation6 + $0x88] sm:$0xff]
    %v440 = vld [vmem:[#allocation6 + $0x90] sm:$0xff]
    %v441 = vld [vmem:[#allocation6 + $0x98] sm:$0xff]
    %v442 = vld [vmem:[#allocation6 + $0xa0] sm:$0xff]
    %v443 = vld [vmem:[#allocation6 + $0xa8] sm:$0xff]
    %v444 = vld [vmem:[#allocation6 + $0xb0] sm:$0xff]
    %v445 = vld [vmem:[#allocation6 + $0xb8] sm:$0xff]
    %v446 = vld [vmem:[#allocation6 + $0xc0] sm:$0xff]
    %v447 = vld [vmem:[#allocation6 + $0xc8] sm:$0xff]
    %v448 = vld [vmem:[#allocation6 + $0xd0] sm:$0xff]
    %v449 = vld [vmem:[#allocation6 + $0xd8] sm:$0xff]
    %v450 = vld [vmem:[#allocation6 + $0xe0] sm:$0xff]
    %v451 = vld [vmem:[#allocation6 + $0xe8] sm:$0xff]
    %v452 = vld [vmem:[#allocation6 + $0xf0] sm:$0xff]
    %v453 = vld [vmem:[#allocation6 + $0xf8] sm:$0xff]
    %v454 = vld [vmem:[%s7] sm:$0x3]
    %v456 = vlaneseq
    %v457 = vshrl.u32 %v456, 7
    %v458 = vsub.s32 0, %v457
    %v459 = vrot.slane %v454, %v458
    %v460 = vlaneseq
    %v461 = vshrl.u32 %v460, 7
    %v462 = vsub.s32 1, %v461
    %v463 = vrot.slane %v454, %v462
    %v498 = vunpack.c.l.b16 %v422
    %v499 = vunpack.c.h.b16 %v422
    %v500 = vunpack.c.l.b16 %v423
    %v501 = vunpack.c.h.b16 %v423
    %v502 = vunpack.c.l.b16 %v424
    %v503 = vunpack.c.h.b16 %v424
    %v504 = vunpack.c.l.b16 %v425
    %v505 = vunpack.c.h.b16 %v425
    %v506 = vunpack.c.l.b16 %v426
    %v507 = vunpack.c.h.b16 %v426
    %v508 = vunpack.c.l.b16 %v427
    %v509 = vunpack.c.h.b16 %v427
    %v510 = vunpack.c.l.b16 %v428
    %v511 = vunpack.c.h.b16 %v428
    %v512 = vunpack.c.l.b16 %v429
    %v513 = vunpack.c.h.b16 %v429
    %v514 = vunpack.c.l.b16 %v430
    %v515 = vunpack.c.h.b16 %v430
    %v516 = vunpack.c.l.b16 %v431
    %v517 = vunpack.c.h.b16 %v431
    %v518 = vunpack.c.l.b16 %v432
    %v519 = vunpack.c.h.b16 %v432
    %v520 = vunpack.c.l.b16 %v433
    %v521 = vunpack.c.h.b16 %v433
    %v522 = vunpack.c.l.b16 %v434
    %v523 = vunpack.c.h.b16 %v434
    %v524 = vunpack.c.l.b16 %v435
    %v525 = vunpack.c.h.b16 %v435
    %v526 = vunpack.c.l.b16 %v436
    %v527 = vunpack.c.h.b16 %v436
    %v528 = vunpack.c.l.b16 %v437
    %v529 = vunpack.c.h.b16 %v437
    %v530 = vunpack.c.l.b16 %v438
    %v531 = vunpack.c.h.b16 %v438
    %v532 = vunpack.c.l.b16 %v439
    %v533 = vunpack.c.h.b16 %v439
    %v534 = vunpack.c.l.b16 %v440
    %v535 = vunpack.c.h.b16 %v440
    %v536 = vunpack.c.l.b16 %v441
    %v537 = vunpack.c.h.b16 %v441
    %v538 = vunpack.c.l.b16 %v442
    %v539 = vunpack.c.h.b16 %v442
    %v540 = vunpack.c.l.b16 %v443
    %v541 = vunpack.c.h.b16 %v443
    %v542 = vunpack.c.l.b16 %v444
    %v543 = vunpack.c.h.b16 %v444
    %v544 = vunpack.c.l.b16 %v445
    %v545 = vunpack.c.h.b16 %v445
    %v546 = vunpack.c.l.b16 %v446
    %v547 = vunpack.c.h.b16 %v446
    %v548 = vunpack.c.l.b16 %v447
    %v549 = vunpack.c.h.b16 %v447
    %v550 = vunpack.c.l.b16 %v448
    %v551 = vunpack.c.h.b16 %v448
    %v552 = vunpack.c.l.b16 %v449
    %v553 = vunpack.c.h.b16 %v449
    %v554 = vunpack.c.l.b16 %v450
    %v555 = vunpack.c.h.b16 %v450
    %v556 = vunpack.c.l.b16 %v451
    %v557 = vunpack.c.h.b16 %v451
    %v558 = vunpack.c.l.b16 %v452
    %v559 = vunpack.c.h.b16 %v452
    %v560 = vunpack.c.l.b16 %v453
    %v561 = vunpack.c.h.b16 %v453
    %v562 = vpack.c.b16 %v500, %v498
    %v563 = vpack.c.b16 %v501, %v499
    %v564 = vpack.c.b16 %v504, %v502
    %v565 = vpack.c.b16 %v505, %v503
    %v566 = vpack.c.b16 %v508, %v506
    %v567 = vpack.c.b16 %v509, %v507
    %v568 = vpack.c.b16 %v512, %v510
    %v569 = vpack.c.b16 %v513, %v511
    %v570 = vpack.c.b16 %v516, %v514
    %v571 = vpack.c.b16 %v517, %v515
    %v572 = vpack.c.b16 %v520, %v518
    %v573 = vpack.c.b16 %v521, %v519
    %v574 = vpack.c.b16 %v524, %v522
    %v575 = vpack.c.b16 %v525, %v523
    %v576 = vpack.c.b16 %v528, %v526
    %v577 = vpack.c.b16 %v529, %v527
    %v578 = vpack.c.b16 %v532, %v530
    %v579 = vpack.c.b16 %v533, %v531
    %v580 = vpack.c.b16 %v536, %v534
    %v581 = vpack.c.b16 %v537, %v535
    %v582 = vpack.c.b16 %v540, %v538
    %v583 = vpack.c.b16 %v541, %v539
    %v584 = vpack.c.b16 %v544, %v542
    %v585 = vpack.c.b16 %v545, %v543
    %v586 = vpack.c.b16 %v548, %v546
    %v587 = vpack.c.b16 %v549, %v547
    %v588 = vpack.c.b16 %v552, %v550
    %v589 = vpack.c.b16 %v553, %v551
    %v590 = vpack.c.b16 %v556, %v554
    %v591 = vpack.c.b16 %v557, %v555
    %v592 = vpack.c.b16 %v560, %v558
    %v593 = vpack.c.b16 %v561, %v559
    %626 = vmatprep.subr.bf16.mxu0 %v563
    %627 = vmatpush1.bf16.msra.mxu0 %v562
    %628 = vmatprep.subr.bf16.mxu0 %v565
    %629 = vmatpush1.bf16.msra.mxu0 %v564
    %630 = vmatprep.subr.bf16.mxu0 %v567
    %631 = vmatpush1.bf16.msra.mxu0 %v566
    %632 = vmatprep.subr.bf16.mxu0 %v569
    %633 = vmatpush1.bf16.msra.mxu0 %v568
    %634 = vmatprep.subr.bf16.mxu0 %v571
    %635 = vmatpush1.bf16.msra.mxu0 %v570
    %636 = vmatprep.subr.bf16.mxu0 %v573
    %637 = vmatpush1.bf16.msra.mxu0 %v572
    %638 = vmatprep.subr.bf16.mxu0 %v575
    %639 = vmatpush1.bf16.msra.mxu0 %v574
    %640 = vmatprep.subr.bf16.mxu0 %v577
    %641 = vmatpush1.bf16.msra.mxu0 %v576
    %642 = vmatprep.subr.bf16.mxu0 %v579
    %643 = vmatpush1.bf16.msra.mxu0 %v578
    %644 = vmatprep.subr.bf16.mxu0 %v581
    %645 = vmatpush1.bf16.msra.mxu0 %v580
    %646 = vmatprep.subr.bf16.mxu0 %v583
    %647 = vmatpush1.bf16.msra.mxu0 %v582
    %648 = vmatprep.subr.bf16.mxu0 %v585
    %649 = vmatpush1.bf16.msra.mxu0 %v584
    %650 = vmatprep.subr.bf16.mxu0 %v587
    %651 = vmatpush1.bf16.msra.mxu0 %v586
    %652 = vmatprep.subr.bf16.mxu0 %v589
    %653 = vmatpush1.bf16.msra.mxu0 %v588
    %654 = vmatprep.subr.bf16.mxu0 %v591
    %655 = vmatpush1.bf16.msra.mxu0 %v590
    %656 = vmatprep.subr.bf16.mxu0 %v593
    %657 = vmatpush1.bf16.msra.mxu0 %v592
    %658 = vmatprep.mubr.bf16.mxu0 %v421
    %659 = vmatmul.mubr.bf16.gmra.mrb[0].mxu0 %v420
    %v660 = vpop.f32.mrb[0].mxu0
    %v661 = vadd.f32 %v459, %v660
    %v662 = vpop.f32.mrb[0].mxu0
    %v663 = vadd.f32 %v463, %v662
    %v664 = vpop.f32.mrb[0].mxu0
    %v665 = vpop.f32.mrb[0].mxu0
    %666 = vdwg.mxu0
    %v667 = vmax.f32 %v661, 0.0
    %v668 = vmax.f32 %v663, 0.0
    %v669 = vpack.c.bf16 %v667, %v667
    %v670 = vpack.c.bf16 %v668, %v668
    %v671 = vld [vmem:[#allocation8] sm:$0xff]
    %v672 = vld [vmem:[#allocation8 + $0x8] sm:$0xff]
    %v673 = vld [vmem:[#allocation8 + $0x10] sm:$0xff]
    %v674 = vld [vmem:[#allocation8 + $0x18] sm:$0xff]
    %v675 = vld [vmem:[#allocation8 + $0x20] sm:$0xff]
    %v676 = vld [vmem:[#allocation8 + $0x28] sm:$0xff]
    %v677 = vld [vmem:[#allocation8 + $0x30] sm:$0xff]
    %v678 = vld [vmem:[#allocation8 + $0x38] sm:$0xff]
    %v679 = vld [vmem:[#allocation8 + $0x40] sm:$0xff]
    %v680 = vld [vmem:[#allocation8 + $0x48] sm:$0xff]
    %v681 = vld [vmem:[#allocation8 + $0x50] sm:$0xff]
    %v682 = vld [vmem:[#allocation8 + $0x58] sm:$0xff]
    %v683 = vld [vmem:[#allocation8 + $0x60] sm:$0xff]
    %v684 = vld [vmem:[#allocation8 + $0x68] sm:$0xff]
    %v685 = vld [vmem:[#allocation8 + $0x70] sm:$0xff]
    %v686 = vld [vmem:[#allocation8 + $0x78] sm:$0xff]
    %v687 = vld [vmem:[#allocation8 + $0x80] sm:$0xff]
    %v688 = vld [vmem:[#allocation8 + $0x88] sm:$0xff]
    %v689 = vld [vmem:[#allocation8 + $0x90] sm:$0xff]
    %v690 = vld [vmem:[#allocation8 + $0x98] sm:$0xff]
    %v691 = vld [vmem:[#allocation8 + $0xa0] sm:$0xff]
    %v692 = vld [vmem:[#allocation8 + $0xa8] sm:$0xff]
    %v693 = vld [vmem:[#allocation8 + $0xb0] sm:$0xff]
    %v694 = vld [vmem:[#allocation8 + $0xb8] sm:$0xff]
    %v695 = vld [vmem:[#allocation8 + $0xc0] sm:$0xff]
    %v696 = vld [vmem:[#allocation8 + $0xc8] sm:$0xff]
    %v697 = vld [vmem:[#allocation8 + $0xd0] sm:$0xff]
    %v698 = vld [vmem:[#allocation8 + $0xd8] sm:$0xff]
    %v699 = vld [vmem:[#allocation8 + $0xe0] sm:$0xff]
    %v700 = vld [vmem:[#allocation8 + $0xe8] sm:$0xff]
    %v701 = vld [vmem:[#allocation8 + $0xf0] sm:$0xff]
    %v702 = vld [vmem:[#allocation8 + $0xf8] sm:$0xff]
    %v703 = vld [vmem:[%s9] sm:$0x3]
    %v705 = vlaneseq
    %v706 = vshrl.u32 %v705, 7
    %v707 = vsub.s32 0, %v706
    %v708 = vrot.slane %v703, %v707
    %v709 = vlaneseq
    %v710 = vshrl.u32 %v709, 7
    %v711 = vsub.s32 1, %v710
    %v712 = vrot.slane %v703, %v711
    %v747 = vunpack.c.l.b16 %v671
    %v748 = vunpack.c.h.b16 %v671
    %v749 = vunpack.c.l.b16 %v672
    %v750 = vunpack.c.h.b16 %v672
    %v751 = vunpack.c.l.b16 %v673
    %v752 = vunpack.c.h.b16 %v673
    %v753 = vunpack.c.l.b16 %v674
    %v754 = vunpack.c.h.b16 %v674
    %v755 = vunpack.c.l.b16 %v675
    %v756 = vunpack.c.h.b16 %v675
    %v757 = vunpack.c.l.b16 %v676
    %v758 = vunpack.c.h.b16 %v676
    %v759 = vunpack.c.l.b16 %v677
    %v760 = vunpack.c.h.b16 %v677
    %v761 = vunpack.c.l.b16 %v678
    %v762 = vunpack.c.h.b16 %v678
    %v763 = vunpack.c.l.b16 %v679
    %v764 = vunpack.c.h.b16 %v679
    %v765 = vunpack.c.l.b16 %v680
    %v766 = vunpack.c.h.b16 %v680
    %v767 = vunpack.c.l.b16 %v681
    %v768 = vunpack.c.h.b16 %v681
    %v769 = vunpack.c.l.b16 %v682
    %v770 = vunpack.c.h.b16 %v682
    %v771 = vunpack.c.l.b16 %v683
    %v772 = vunpack.c.h.b16 %v683
    %v773 = vunpack.c.l.b16 %v684
    %v774 = vunpack.c.h.b16 %v684
    %v775 = vunpack.c.l.b16 %v685
    %v776 = vunpack.c.h.b16 %v685
    %v777 = vunpack.c.l.b16 %v686
    %v778 = vunpack.c.h.b16 %v686
    %v779 = vunpack.c.l.b16 %v687
    %v780 = vunpack.c.h.b16 %v687
    %v781 = vunpack.c.l.b16 %v688
    %v782 = vunpack.c.h.b16 %v688
    %v783 = vunpack.c.l.b16 %v689
    %v784 = vunpack.c.h.b16 %v689
    %v785 = vunpack.c.l.b16 %v690
    %v786 = vunpack.c.h.b16 %v690
    %v787 = vunpack.c.l.b16 %v691
    %v788 = vunpack.c.h.b16 %v691
    %v789 = vunpack.c.l.b16 %v692
    %v790 = vunpack.c.h.b16 %v692
    %v791 = vunpack.c.l.b16 %v693
    %v792 = vunpack.c.h.b16 %v693
    %v793 = vunpack.c.l.b16 %v694
    %v794 = vunpack.c.h.b16 %v694
    %v795 = vunpack.c.l.b16 %v695
    %v796 = vunpack.c.h.b16 %v695
    %v797 = vunpack.c.l.b16 %v696
    %v798 = vunpack.c.h.b16 %v696
    %v799 = vunpack.c.l.b16 %v697
    %v800 = vunpack.c.h.b16 %v697
    %v801 = vunpack.c.l.b16 %v698
    %v802 = vunpack.c.h.b16 %v698
    %v803 = vunpack.c.l.b16 %v699
    %v804 = vunpack.c.h.b16 %v699
    %v805 = vunpack.c.l.b16 %v700
    %v806 = vunpack.c.h.b16 %v700
    %v807 = vunpack.c.l.b16 %v701
    %v808 = vunpack.c.h.b16 %v701
    %v809 = vunpack.c.l.b16 %v702
    %v810 = vunpack.c.h.b16 %v702
    %v811 = vpack.c.b16 %v749, %v747
    %v812 = vpack.c.b16 %v750, %v748
    %v813 = vpack.c.b16 %v753, %v751
    %v814 = vpack.c.b16 %v754, %v752
    %v815 = vpack.c.b16 %v757, %v755
    %v816 = vpack.c.b16 %v758, %v756
    %v817 = vpack.c.b16 %v761, %v759
    %v818 = vpack.c.b16 %v762, %v760
    %v819 = vpack.c.b16 %v765, %v763
    %v820 = vpack.c.b16 %v766, %v764
    %v821 = vpack.c.b16 %v769, %v767
    %v822 = vpack.c.b16 %v770, %v768
    %v823 = vpack.c.b16 %v773, %v771
    %v824 = vpack.c.b16 %v774, %v772
    %v825 = vpack.c.b16 %v777, %v775
    %v826 = vpack.c.b16 %v778, %v776
    %v827 = vpack.c.b16 %v781, %v779
    %v828 = vpack.c.b16 %v782, %v780
    %v829 = vpack.c.b16 %v785, %v783
    %v830 = vpack.c.b16 %v786, %v784
    %v831 = vpack.c.b16 %v789, %v787
    %v832 = vpack.c.b16 %v790, %v788
    %v833 = vpack.c.b16 %v793, %v791
    %v834 = vpack.c.b16 %v794, %v792
    %v835 = vpack.c.b16 %v797, %v795
    %v836 = vpack.c.b16 %v798, %v796
    %v837 = vpack.c.b16 %v801, %v799
    %v838 = vpack.c.b16 %v802, %v800
    %v839 = vpack.c.b16 %v805, %v803
    %v840 = vpack.c.b16 %v806, %v804
    %v841 = vpack.c.b16 %v809, %v807
    %v842 = vpack.c.b16 %v810, %v808
    %875 = vmatprep.subr.bf16.mxu0 %v812
    %876 = vmatpush1.bf16.msra.mxu0 %v811
    %877 = vmatprep.subr.bf16.mxu0 %v814
    %878 = vmatpush1.bf16.msra.mxu0 %v813
    %879 = vmatprep.subr.bf16.mxu0 %v816
    %880 = vmatpush1.bf16.msra.mxu0 %v815
    %881 = vmatprep.subr.bf16.mxu0 %v818
    %882 = vmatpush1.bf16.msra.mxu0 %v817
    %883 = vmatprep.subr.bf16.mxu0 %v820
    %884 = vmatpush1.bf16.msra.mxu0 %v819
    %885 = vmatprep.subr.bf16.mxu0 %v822
    %886 = vmatpush1.bf16.msra.mxu0 %v821
    %887 = vmatprep.subr.bf16.mxu0 %v824
    %888 = vmatpush1.bf16.msra.mxu0 %v823
    %889 = vmatprep.subr.bf16.mxu0 %v826
    %890 = vmatpush1.bf16.msra.mxu0 %v825
    %891 = vmatprep.subr.bf16.mxu0 %v828
    %892 = vmatpush1.bf16.msra.mxu0 %v827
    %893 = vmatprep.subr.bf16.mxu0 %v830
    %894 = vmatpush1.bf16.msra.mxu0 %v829
    %895 = vmatprep.subr.bf16.mxu0 %v832
    %896 = vmatpush1.bf16.msra.mxu0 %v831
    %897 = vmatprep.subr.bf16.mxu0 %v834
    %898 = vmatpush1.bf16.msra.mxu0 %v833
    %899 = vmatprep.subr.bf16.mxu0 %v836
    %900 = vmatpush1.bf16.msra.mxu0 %v835
    %901 = vmatprep.subr.bf16.mxu0 %v838
    %902 = vmatpush1.bf16.msra.mxu0 %v837
    %903 = vmatprep.subr.bf16.mxu0 %v840
    %904 = vmatpush1.bf16.msra.mxu0 %v839
    %905 = vmatprep.subr.bf16.mxu0 %v842
    %906 = vmatpush1.bf16.msra.mxu0 %v841
    %907 = vmatprep.mubr.bf16.mxu0 %v670
    %908 = vmatmul.mubr.bf16.gmra.mrb[0].mxu0 %v669
    %v909 = vpop.f32.mrb[0].mxu0
    %v910 = vadd.f32 %v708, %v909
    %v911 = vpop.f32.mrb[0].mxu0
    %v912 = vadd.f32 %v712, %v911
    %v913 = vpop.f32.mrb[0].mxu0
    %v914 = vpop.f32.mrb[0].mxu0
    %915 = vdwg.mxu0
    %v916 = vmax.f32 %v910, 0.0
    %v917 = vmax.f32 %v912, 0.0
    %v918 = vpack.c.bf16 %v916, %v916
    %v919 = vpack.c.bf16 %v917, %v917
    %v920 = vld [vmem:[%s10] sm:$0xf]
    %v921 = vld [vmem:[%s10 + $0x4] sm:$0xf]
    %v922 = vld [vmem:[%s10 + $0x8] sm:$0xf]
    %v923 = vld [vmem:[%s10 + $0xc] sm:$0xf]
    %v924 = vld [vmem:[%s10 + $0x10] sm:$0xf]
    %v925 = vld [vmem:[%s10 + $0x14] sm:$0xf]
    %v926 = vld [vmem:[%s10 + $0x18] sm:$0xf]
    %v927 = vld [vmem:[%s10 + $0x1c] sm:$0xf]
    %v928 = vld [vmem:[%s10 + $0x20] sm:$0xf]
    %v929 = vld [vmem:[%s10 + $0x24] sm:$0xf]
    %v930 = vld [vmem:[%s10 + $0x28] sm:$0xf]
    %v931 = vld [vmem:[%s10 + $0x2c] sm:$0xf]
    %v932 = vld [vmem:[%s10 + $0x30] sm:$0xf]
    %v933 = vld [vmem:[%s10 + $0x34] sm:$0xf]
    %v934 = vld [vmem:[%s10 + $0x38] sm:$0xf]
    %v935 = vld [vmem:[%s10 + $0x3c] sm:$0xf]
    %v936 = vld [vmem:[%s10 + $0x40] sm:$0xf]
    %v937 = vld [vmem:[%s10 + $0x44] sm:$0xf]
    %v938 = vld [vmem:[%s10 + $0x48] sm:$0xf]
    %v939 = vld [vmem:[%s10 + $0x4c] sm:$0xf]
    %v940 = vld [vmem:[%s10 + $0x50] sm:$0xf]
    %v941 = vld [vmem:[%s10 + $0x54] sm:$0xf]
    %v942 = vld [vmem:[%s10 + $0x58] sm:$0xf]
    %v943 = vld [vmem:[%s10 + $0x5c] sm:$0xf]
    %v944 = vld [vmem:[%s10 + $0x60] sm:$0xf]
    %v945 = vld [vmem:[%s10 + $0x64] sm:$0xf]
    %v946 = vld [vmem:[%s10 + $0x68] sm:$0xf]
    %v947 = vld [vmem:[%s10 + $0x6c] sm:$0xf]
    %v948 = vld [vmem:[%s10 + $0x70] sm:$0xf]
    %v949 = vld [vmem:[%s10 + $0x74] sm:$0xf]
    %v950 = vld [vmem:[%s10 + $0x78] sm:$0xf]
    %v951 = vld [vmem:[%s10 + $0x7c] sm:$0xf]
    %v952 = vld [vmem:[%s11] sm:$0x1]
    %v954 = vlaneseq
    %v955 = vshrl.u32 %v954, 7
    %v956 = vsub.s32 0, %v955
    %v957 = vrot.slane %v952, %v956
    %v991 = vunpack.c.l.b16 %v920
    %v992 = vunpack.c.l.b16 %v921
    %v993 = vunpack.c.l.b16 %v922
    %v994 = vunpack.c.l.b16 %v923
    %v995 = vunpack.c.l.b16 %v924
    %v996 = vunpack.c.l.b16 %v925
    %v997 = vunpack.c.l.b16 %v926
    %v998 = vunpack.c.l.b16 %v927
    %v999 = vunpack.c.l.b16 %v928
    %v1000 = vunpack.c.l.b16 %v929
    %v1001 = vunpack.c.l.b16 %v930
    %v1002 = vunpack.c.l.b16 %v931
    %v1003 = vunpack.c.l.b16 %v932
    %v1004 = vunpack.c.l.b16 %v933
    %v1005 = vunpack.c.l.b16 %v934
    %v1006 = vunpack.c.l.b16 %v935
    %v1007 = vunpack.c.l.b16 %v936
    %v1008 = vunpack.c.l.b16 %v937
    %v1009 = vunpack.c.l.b16 %v938
    %v1010 = vunpack.c.l.b16 %v939
    %v1011 = vunpack.c.l.b16 %v940
    %v1012 = vunpack.c.l.b16 %v941
    %v1013 = vunpack.c.l.b16 %v942
    %v1014 = vunpack.c.l.b16 %v943
    %v1015 = vunpack.c.l.b16 %v944
    %v1016 = vunpack.c.l.b16 %v945
    %v1017 = vunpack.c.l.b16 %v946
    %v1018 = vunpack.c.l.b16 %v947
    %v1019 = vunpack.c.l.b16 %v948
    %v1020 = vunpack.c.l.b16 %v949
    %v1021 = vunpack.c.l.b16 %v950
    %v1022 = vunpack.c.l.b16 %v951
    %v1023 = vpack.c.b16 %v992, %v991
    %v1024 = vpack.c.b16 %v994, %v993
    %v1025 = vpack.c.b16 %v996, %v995
    %v1026 = vpack.c.b16 %v998, %v997
    %v1027 = vpack.c.b16 %v1000, %v999
    %v1028 = vpack.c.b16 %v1002, %v1001
    %v1029 = vpack.c.b16 %v1004, %v1003
    %v1030 = vpack.c.b16 %v1006, %v1005
    %v1031 = vpack.c.b16 %v1008, %v1007
    %v1032 = vpack.c.b16 %v1010, %v1009
    %v1033 = vpack.c.b16 %v1012, %v1011
    %v1034 = vpack.c.b16 %v1014, %v1013
    %v1035 = vpack.c.b16 %v1016, %v1015
    %v1036 = vpack.c.b16 %v1018, %v1017
    %v1037 = vpack.c.b16 %v1020, %v1019
    %v1038 = vpack.c.b16 %v1022, %v1021
    %1055 = vmatprep.subr.bf16.mxu0 0
    %1056 = vmatpush1.bf16.msra.mxu0 %v1023
    %1057 = vmatprep.subr.bf16.mxu0 0
    %1058 = vmatpush1.bf16.msra.mxu0 %v1024
    %1059 = vmatprep.subr.bf16.mxu0 0
    %1060 = vmatpush1.bf16.msra.mxu0 %v1025
    %1061 = vmatprep.subr.bf16.mxu0 0
    %1062 = vmatpush1.bf16.msra.mxu0 %v1026
    %1063 = vmatprep.subr.bf16.mxu0 0
    %1064 = vmatpush1.bf16.msra.mxu0 %v1027
    %1065 = vmatprep.subr.bf16.mxu0 0
    %1066 = vmatpush1.bf16.msra.mxu0 %v1028
    %1067 = vmatprep.subr.bf16.mxu0 0
    %1068 = vmatpush1.bf16.msra.mxu0 %v1029
    %1069 = vmatprep.subr.bf16.mxu0 0
    %1070 = vmatpush1.bf16.msra.mxu0 %v1030
    %1071 = vmatprep.subr.bf16.mxu0 0
    %1072 = vmatpush1.bf16.msra.mxu0 %v1031
    %1073 = vmatprep.subr.bf16.mxu0 0
    %1074 = vmatpush1.bf16.msra.mxu0 %v1032
    %1075 = vmatprep.subr.bf16.mxu0 0
    %1076 = vmatpush1.bf16.msra.mxu0 %v1033
    %1077 = vmatprep.subr.bf16.mxu0 0
    %1078 = vmatpush1.bf16.msra.mxu0 %v1034
    %1079 = vmatprep.subr.bf16.mxu0 0
    %1080 = vmatpush1.bf16.msra.mxu0 %v1035
    %1081 = vmatprep.subr.bf16.mxu0 0
    %1082 = vmatpush1.bf16.msra.mxu0 %v1036
    %1083 = vmatprep.subr.bf16.mxu0 0
    %1084 = vmatpush1.bf16.msra.mxu0 %v1037
    %1085 = vmatprep.subr.bf16.mxu0 0
    %1086 = vmatpush1.bf16.msra.mxu0 %v1038
    %1087 = vmatprep.mubr.bf16.mxu0 %v919
    %1088 = vmatmul.mubr.bf16.gmra.mrb[0].mxu0 %v918
    %v1089 = vpop.f32.mrb[0].mxu0
    %v1090 = vadd.f32 %v957, %v1089
    %v1091 = vpop.f32.mrb[0].mxu0
    %v1092 = vpop.f32.mrb[0].mxu0
    %v1093 = vpop.f32.mrb[0].mxu0
    %1094 = vdwg.mxu0
    %v1095 = vtanh.pop %v1090
    %v1096 = vstv %s85
    %v1097 = vmul.f32 %v1096, %v1095
    %vm1098 = vcmask 64512
    %1099 = vst.msk [vmem:[#allocation9] sm:$0xff] %vm1098, %v1097
    // Predicated region
    $region62: #{tpu_custom_call.1} parent=1 // pred_check
      _
    $region63: #{tpu_custom_call.1} parent=1 // pred_check_branch
      %1101 = sbr.rel (0) target = $region65
    $region64: #{tpu_custom_call.1} parent=1 // pred_region
      %s1103 = ssub.s32 128, 128
      %1104 = vsyncadd [#allocation5], %s1103
      %s1106 = sshll.u32 [#allocation9], 4
      %s1107 = int_to_ptr.vmem [resolvable:$true] %s1106
      %1109 = dma.vmem_to_hbm [thread:$0]  %s1107, 128, %s12, [#allocation5]
    $region65: #{tpu_custom_call.1} parent=1 // pred_fallthru
      _
    // Predicated region
    $region66: #{tpu_custom_call.1} parent=1 // pred_check
      _
    $region67: #{tpu_custom_call.1} parent=1 // pred_check_branch
      %1111 = sbr.rel (0) target = $region69
    $region68: #{tpu_custom_call.1} parent=1 // pred_region
      %1112 = dma.done [#allocation5], 128
    $region69: #{tpu_custom_call.1} parent=1 // pred_fallthru
      _
    %1113 = vsyncpa [#allocation4], 1
    %1114 = vsyncpa [#allocation7], 1
    %1115 = vsyncpa [#allocation5], 1

</llo_original>
